<compile_context>
chip_gen: v7x
topology: tpu7x:2x2x1
jax: 0.10.0
libtpu: 0.0.40
codegen_flags: <defaults>
</compile_context>

<pallas_src>
import functools

import jax
import jax.numpy as jnp
from jax.experimental import pallas as pl
from jax.experimental.pallas import tpu as pltpu


MAX_TILE_B = 1024  # safe for v7x (64 MiB VMEM); fine on v5e/v6e too.


def _round_up(x, m):
    return ((x + m - 1) // m) * m


def _agent_kernel(x_ref, w1_ref, b1_ref, w2_ref, b2_ref, w3_ref, b3_ref, out_ref):
    """One batch tile: 4 VPU FMAs + 2 MXU matmuls + 2 ReLUs, all lane-dense."""
    x = x_ref[...]                     # (4, TB)   batch on lanes
    w1 = w1_ref[...]                   # (32, 4)

    # ---- layer 1: K=4 contraction as broadcast multiply-adds on the VPU ----
    acc = w1[:, 0:1] * x[0:1, :]                       # (32,1)*(1,TB) -> (32,TB)
    acc = acc + w1[:, 1:2] * x[1:2, :]
    acc = acc + w1[:, 2:3] * x[2:3, :]
    acc = acc + w1[:, 3:4] * x[3:4, :]
    h1 = jnp.maximum(acc + b1_ref[...], 0.0)           # (32, TB)

    # ---- layer 2: 32x32 on the MXU, lane-dense output ----
    h2 = jnp.dot(w2_ref[...], h1, preferred_element_type=jnp.float32)  # (32, TB)
    h2 = jnp.maximum(h2 + b2_ref[...], 0.0)

    # ---- value head: 2x32 on the MXU ----
    v = jnp.dot(w3_ref[...], h2, preferred_element_type=jnp.float32)   # (2, TB)
    out_ref[...] = (v + b3_ref[...]).astype(out_ref.dtype)


@jax.jit
def agent_forward(state, params):
    """state: (B, 4) float32.

    params: PyTorch-layout weights — w*: (out, in), b*: (out, 1).
    Returns (B, 2) float32 values.
    """
    B = state.shape[0]
    w1, b1 = params["w1"], params["b1"]   # (32, 4), (32, 1)
    w2, b2 = params["w2"], params["b2"]   # (32, 32), (32, 1)
    w3, b3 = params["w3"], params["b3"]   # (2, 32), (2, 1)

    # Transposed, lane-dense layout: batch on the last (lane) axis.
    x_t = state.T                                         # (4, B)

    # Tile & pad the batch axis (multiple of 128 lanes; multiple of TILE_B).
    tile_b = min(MAX_TILE_B, _round_up(B, 128))
    b_pad = _round_up(B, tile_b)
    if b_pad != B:
        x_t = jnp.pad(x_t, ((0, 0), (0, b_pad - B)))      # zero rows are harmless
    grid = (b_pad // tile_b,)

    const = lambda shape: pl.BlockSpec(shape, lambda i: (0, 0))  # weights: resident

    out_t = pl.pallas_call(
        _agent_kernel,
        out_shape=jax.ShapeDtypeStruct((2, b_pad), jnp.float32),
        grid=grid,
        in_specs=[
            pl.BlockSpec((4, tile_b), lambda i: (0, i)),   # x tile
            const((32, 4)),  const((32, 1)),               # w1, b1
            const((32, 32)), const((32, 1)),               # w2, b2
            const((2, 32)),  const((2, 1)),                # w3, b3
        ],
        out_specs=pl.BlockSpec((2, tile_b), lambda i: (0, i)),
        compiler_params=pltpu.CompilerParams(
            dimension_semantics=("parallel",)),            # megacore on v7x
    )(x_t, w1, b1, w2, b2, w3, b3)

    return out_t[:, :B].T                                  # (B, 2)


def init_params(key):
    """PyTorch nn.Linear default init (U[-1/sqrt(fan_in), +]); (out, in) layout."""
    def linear(k, fan_in, fan_out):
        kw, kb = jax.random.split(k)
        bound = 1.0 / jnp.sqrt(jnp.float32(fan_in))
        w = jax.random.uniform(kw, (fan_out, fan_in), jnp.float32, -bound, bound)
        b = jax.random.uniform(kb, (fan_out, 1), jnp.float32, -bound, bound)
        return w, b

    k1, k2, k3 = jax.random.split(key, 3)
    w1, b1 = linear(k1, 4, 32)
    w2, b2 = linear(k2, 32, 32)
    w3, b3 = linear(k3, 32, 2)
    return {"w1": w1, "b1": b1, "w2": w2, "b2": b2, "w3": w3, "b3": b3}


def _reference(state, p):
    h1 = jnp.maximum(state @ p["w1"].T + p["b1"].T, 0.0)
    h2 = jnp.maximum(h1 @ p["w2"].T + p["b2"].T, 0.0)
    return h2 @ p["w3"].T + p["b3"].T


if __name__ == "__main__":
    key = jax.random.PRNGKey(0)
    kp, kx = jax.random.split(key)

    params = init_params(kp)
    state = jax.random.normal(kx, (8, 4), dtype=jnp.float32)  # batch=8, 4 state dims

    value = agent_forward(state, params)
    jax.block_until_ready(value)

    # correctness check against plain-JAX reference
    ref = _reference(state, params)
    assert value.shape == (8, 2)
    assert jnp.allclose(value, ref, atol=1e-5, rtol=1e-5)

    # also exercise a multi-tile batch to cover the grid path
    big_state = jax.random.normal(kx, (3000, 4), dtype=jnp.float32)
    big_val = agent_forward(big_state, params)
    jax.block_until_ready(big_val)
    assert big_val.shape == (3000, 2)
    assert jnp.allclose(big_val, _reference(big_state, params), atol=1e-4, rtol=1e-4)

    print("KERNEL_OK")
</pallas_src>

<mosaic_0001>
module attributes {stable_mosaic.version = 11 : i64} {
  func.func @_agent_kernel(%arg0: i32, %arg1: memref<4x128xf32, #tpu.memory_space<vmem>>, %arg2: memref<32x4xf32, #tpu.memory_space<vmem>>, %arg3: memref<32x1xf32, #tpu.memory_space<vmem>>, %arg4: memref<32x32xf32, #tpu.memory_space<vmem>>, %arg5: memref<32x1xf32, #tpu.memory_space<vmem>>, %arg6: memref<2x32xf32, #tpu.memory_space<vmem>>, %arg7: memref<2x1xf32, #tpu.memory_space<vmem>>, %arg8: memref<2x128xf32, #tpu.memory_space<vmem>>) attributes {dimension_semantics = [#tpu.dimension_semantics<parallel>], iteration_bounds = array<i64: 1>, scalar_prefetch = 0 : i64, scratch_operands = 0 : i64, tpu.core_type = #tpu.core_type<tc>, window_params = [{transform_indices = @transform_0, window_bounds = array<i64: 4, 128>}, {pipeline_mode = #tpu.pipeline_mode<synchronous>, transform_indices = @transform_1, window_bounds = array<i64: 32, 4>}, {pipeline_mode = #tpu.pipeline_mode<synchronous>, transform_indices = @transform_2, window_bounds = array<i64: 32, 1>}, {pipeline_mode = #tpu.pipeline_mode<synchronous>, transform_indices = @transform_3, window_bounds = array<i64: 32, 32>}, {pipeline_mode = #tpu.pipeline_mode<synchronous>, transform_indices = @transform_4, window_bounds = array<i64: 32, 1>}, {pipeline_mode = #tpu.pipeline_mode<synchronous>, transform_indices = @transform_5, window_bounds = array<i64: 2, 32>}, {pipeline_mode = #tpu.pipeline_mode<synchronous>, transform_indices = @transform_6, window_bounds = array<i64: 2, 1>}, {transform_indices = @transform_7, window_bounds = array<i64: 2, 128>}]} {
    %c0 = arith.constant 0 : index
    %c0_0 = arith.constant 0 : index
    %0 = vector.load %arg1[%c0, %c0_0] : memref<4x128xf32, #tpu.memory_space<vmem>>, vector<4x128xf32>
    %c0_1 = arith.constant 0 : index
    %c0_2 = arith.constant 0 : index
    %1 = vector.load %arg2[%c0_1, %c0_2] : memref<32x4xf32, #tpu.memory_space<vmem>>, vector<32x4xf32>
    %2 = vector.extract_strided_slice %1 {offsets = [0, 0], sizes = [32, 1], strides = [1, 1]} : vector<32x4xf32> to vector<32x1xf32>
    %3 = vector.extract_strided_slice %0 {offsets = [0, 0], sizes = [1, 128], strides = [1, 1]} : vector<4x128xf32> to vector<1x128xf32>
    %4 = vector.broadcast %2 : vector<32x1xf32> to vector<32x128xf32>
    %5 = vector.broadcast %3 : vector<1x128xf32> to vector<32x128xf32>
    %6 = arith.mulf %4, %5 : vector<32x128xf32>
    %7 = vector.extract_strided_slice %1 {offsets = [0, 1], sizes = [32, 1], strides = [1, 1]} : vector<32x4xf32> to vector<32x1xf32>
    %8 = vector.extract_strided_slice %0 {offsets = [1, 0], sizes = [1, 128], strides = [1, 1]} : vector<4x128xf32> to vector<1x128xf32>
    %9 = vector.broadcast %7 : vector<32x1xf32> to vector<32x128xf32>
    %10 = vector.broadcast %8 : vector<1x128xf32> to vector<32x128xf32>
    %11 = arith.mulf %9, %10 : vector<32x128xf32>
    %12 = arith.addf %6, %11 : vector<32x128xf32>
    %13 = vector.extract_strided_slice %1 {offsets = [0, 2], sizes = [32, 1], strides = [1, 1]} : vector<32x4xf32> to vector<32x1xf32>
    %14 = vector.extract_strided_slice %0 {offsets = [2, 0], sizes = [1, 128], strides = [1, 1]} : vector<4x128xf32> to vector<1x128xf32>
    %15 = vector.broadcast %13 : vector<32x1xf32> to vector<32x128xf32>
    %16 = vector.broadcast %14 : vector<1x128xf32> to vector<32x128xf32>
    %17 = arith.mulf %15, %16 : vector<32x128xf32>
    %18 = arith.addf %12, %17 : vector<32x128xf32>
    %19 = vector.extract_strided_slice %1 {offsets = [0, 3], sizes = [32, 1], strides = [1, 1]} : vector<32x4xf32> to vector<32x1xf32>
    %20 = vector.extract_strided_slice %0 {offsets = [3, 0], sizes = [1, 128], strides = [1, 1]} : vector<4x128xf32> to vector<1x128xf32>
    %21 = vector.broadcast %19 : vector<32x1xf32> to vector<32x128xf32>
    %22 = vector.broadcast %20 : vector<1x128xf32> to vector<32x128xf32>
    %23 = arith.mulf %21, %22 : vector<32x128xf32>
    %24 = arith.addf %18, %23 : vector<32x128xf32>
    %c0_3 = arith.constant 0 : index
    %c0_4 = arith.constant 0 : index
    %25 = vector.load %arg3[%c0_3, %c0_4] : memref<32x1xf32, #tpu.memory_space<vmem>>, vector<32x1xf32>
    %26 = vector.broadcast %25 : vector<32x1xf32> to vector<32x128xf32>
    %27 = arith.addf %24, %26 : vector<32x128xf32>
    %cst = arith.constant 0.000000e+00 : f32
    %28 = vector.broadcast %cst : f32 to vector<32x128xf32>
    %29 = arith.maximumf %27, %28 : vector<32x128xf32>
    %c0_5 = arith.constant 0 : index
    %c0_6 = arith.constant 0 : index
    %30 = vector.load %arg4[%c0_5, %c0_6] : memref<32x32xf32, #tpu.memory_space<vmem>>, vector<32x32xf32>
    %cst_7 = arith.constant dense<0.000000e+00> : vector<32x128xf32>
    %31 = tpu.matmul %30, %29, %cst_7 {dimension_numbers = #tpu.dot_dimension_numbers<[1], [0], [0], [1], [0, 0, 1, 1], [], []>} : vector<32x32xf32>, vector<32x128xf32>, vector<32x128xf32> -> vector<32x128xf32>
    %c0_8 = arith.constant 0 : index
    %c0_9 = arith.constant 0 : index
    %32 = vector.load %arg5[%c0_8, %c0_9] : memref<32x1xf32, #tpu.memory_space<vmem>>, vector<32x1xf32>
    %33 = vector.broadcast %32 : vector<32x1xf32> to vector<32x128xf32>
    %34 = arith.addf %31, %33 : vector<32x128xf32>
    %cst_10 = arith.constant 0.000000e+00 : f32
    %35 = vector.broadcast %cst_10 : f32 to vector<32x128xf32>
    %36 = arith.maximumf %34, %35 : vector<32x128xf32>
    %c0_11 = arith.constant 0 : index
    %c0_12 = arith.constant 0 : index
    %37 = vector.load %arg6[%c0_11, %c0_12] : memref<2x32xf32, #tpu.memory_space<vmem>>, vector<2x32xf32>
    %cst_13 = arith.constant dense<0.000000e+00> : vector<2x128xf32>
    %38 = tpu.matmul %37, %36, %cst_13 {dimension_numbers = #tpu.dot_dimension_numbers<[1], [0], [0], [1], [0, 0, 1, 1], [], []>} : vector<2x32xf32>, vector<32x128xf32>, vector<2x128xf32> -> vector<2x128xf32>
    %c0_14 = arith.constant 0 : index
    %c0_15 = arith.constant 0 : index
    %39 = vector.load %arg7[%c0_14, %c0_15] : memref<2x1xf32, #tpu.memory_space<vmem>>, vector<2x1xf32>
    %40 = vector.broadcast %39 : vector<2x1xf32> to vector<2x128xf32>
    %41 = arith.addf %38, %40 : vector<2x128xf32>
    %c0_16 = arith.constant 0 : index
    %c0_17 = arith.constant 0 : index
    %42 = vector.load %arg8[%c0_16, %c0_17] : memref<2x128xf32, #tpu.memory_space<vmem>>, vector<2x128xf32>
    tpu.vector_store %arg8[%c0_16, %c0_17], %41 {strides = array<i32>} : memref<2x128xf32, #tpu.memory_space<vmem>>, vector<2x128xf32>,
    return
  }
  func.func @transform_0(%arg0: i32) -> (i32, i32) {
    %c0_i32 = arith.constant 0 : i32
    %c0_i32_0 = arith.constant 0 : i32
    return %c0_i32, %arg0 : i32, i32
  }
  func.func @transform_1(%arg0: i32) -> (i32, i32) {
    %c0_i32 = arith.constant 0 : i32
    %c0_i32_0 = arith.constant 0 : i32
    %c0_i32_1 = arith.constant 0 : i32
    return %c0_i32, %c0_i32_0 : i32, i32
  }
  func.func @transform_2(%arg0: i32) -> (i32, i32) {
    %c0_i32 = arith.constant 0 : i32
    %c0_i32_0 = arith.constant 0 : i32
    %c0_i32_1 = arith.constant 0 : i32
    return %c0_i32, %c0_i32_0 : i32, i32
  }
  func.func @transform_3(%arg0: i32) -> (i32, i32) {
    %c0_i32 = arith.constant 0 : i32
    %c0_i32_0 = arith.constant 0 : i32
    %c0_i32_1 = arith.constant 0 : i32
    return %c0_i32, %c0_i32_0 : i32, i32
  }
  func.func @transform_4(%arg0: i32) -> (i32, i32) {
    %c0_i32 = arith.constant 0 : i32
    %c0_i32_0 = arith.constant 0 : i32
    %c0_i32_1 = arith.constant 0 : i32
    return %c0_i32, %c0_i32_0 : i32, i32
  }
  func.func @transform_5(%arg0: i32) -> (i32, i32) {
    %c0_i32 = arith.constant 0 : i32
    %c0_i32_0 = arith.constant 0 : i32
    %c0_i32_1 = arith.constant 0 : i32
    return %c0_i32, %c0_i32_0 : i32, i32
  }
  func.func @transform_6(%arg0: i32) -> (i32, i32) {
    %c0_i32 = arith.constant 0 : i32
    %c0_i32_0 = arith.constant 0 : i32
    %c0_i32_1 = arith.constant 0 : i32
    return %c0_i32, %c0_i32_0 : i32, i32
  }
  func.func @transform_7(%arg0: i32) -> (i32, i32) {
    %c0_i32 = arith.constant 0 : i32
    %c0_i32_0 = arith.constant 0 : i32
    return %c0_i32, %arg0 : i32, i32
  }
}

</mosaic_0001>

<llo_original>
// kernel: agent_forward.1
$region0: #{agent_forward.1}
  #allocation0 [shape = 'u32[]', space=smem, size = 0x4, offset = 0x4, fixed_abs, tag = 'smem constant byte address 0x4 - core index']
  #allocation1 [shape = 'u32[144,128]{1,0:T(1,128)}', space=vmem, size = 0x12000, scoped, tag = 'internal scratch']
  %s0 = inlined_call_operand.vmem [shape: f32[4,128], index: 0, kind: input, shape index: {}]
  %s1 = inlined_call_operand.vmem [shape: f32[32,4], index: 1, kind: input, shape index: {}]
  %s2 = inlined_call_operand.vmem [shape: f32[32,1], index: 2, kind: input, shape index: {}]
  %s3 = inlined_call_operand.vmem [shape: f32[32,32], index: 3, kind: input, shape index: {}]
  %s4 = inlined_call_operand.vmem [shape: f32[32,1], index: 4, kind: input, shape index: {}]
  %s5 = inlined_call_operand.vmem [shape: f32[2,32], index: 5, kind: input, shape index: {}]
  %s6 = inlined_call_operand.vmem [shape: f32[2,1], index: 6, kind: input, shape index: {}]
  %s7 = inlined_call_operand.vmem [shape: f32[2,128], index: 7, kind: output, shape index: {}]
  %s8 = sld [smem:[#allocation0]]
  $region38: #{agent_forward.1} parent=0
    _
  %s10 = ssub.s32 1, %s8
  %s11 = scalar_select 0, %s10, %s8
  // Predicated region
  $region2: #{agent_forward.1} parent=0 // pred_check
    _
  $region3: #{agent_forward.1} parent=0 // pred_check_branch
    %13 = sbr.rel (0) target = $region5
  $region4: #{agent_forward.1} parent=0 // pred_region
    _
  $region5: #{agent_forward.1} parent=0 // pred_fallthru
    _
  // Predicated region
  $region6: #{agent_forward.1} parent=0 // pred_check
    _
  $region7: #{agent_forward.1} parent=0 // pred_check_branch
    %15 = sbr.rel (0) target = $region9
  $region8: #{agent_forward.1} parent=0 // pred_region
    _
  $region9: #{agent_forward.1} parent=0 // pred_fallthru
    _
  // Predicated region
  $region10: #{agent_forward.1} parent=0 // pred_check
    _
  $region11: #{agent_forward.1} parent=0 // pred_check_branch
    %17 = sbr.rel (0) target = $region13
  $region12: #{agent_forward.1} parent=0 // pred_region
    _
  $region13: #{agent_forward.1} parent=0 // pred_fallthru
    _
  // Predicated region
  $region14: #{agent_forward.1} parent=0 // pred_check
    _
  $region15: #{agent_forward.1} parent=0 // pred_check_branch
    %19 = sbr.rel (0) target = $region17
  $region16: #{agent_forward.1} parent=0 // pred_region
    _
  $region17: #{agent_forward.1} parent=0 // pred_fallthru
    _
  // Predicated region
  $region18: #{agent_forward.1} parent=0 // pred_check
    _
  $region19: #{agent_forward.1} parent=0 // pred_check_branch
    %21 = sbr.rel (0) target = $region21
  $region20: #{agent_forward.1} parent=0 // pred_region
    _
  $region21: #{agent_forward.1} parent=0 // pred_fallthru
    _
  // Predicated region
  $region22: #{agent_forward.1} parent=0 // pred_check
    _
  $region23: #{agent_forward.1} parent=0 // pred_check_branch
    %23 = sbr.rel (0) target = $region25
  $region24: #{agent_forward.1} parent=0 // pred_region
    _
  $region25: #{agent_forward.1} parent=0 // pred_fallthru
    _
  // Predicated region
  $region26: #{agent_forward.1} parent=0 // pred_check
    _
  $region27: #{agent_forward.1} parent=0 // pred_check_branch
    %25 = sbr.rel (0) target = $region29
  $region28: #{agent_forward.1} parent=0 // pred_region
    _
  $region29: #{agent_forward.1} parent=0 // pred_fallthru
    _
  %v26 = vld [vmem:[%s0] sm:$0xf]
  %v27 = vld [vmem:[%s1] sm:$0xff]
  %v28 = vld [vmem:[%s1 + $0x8] sm:$0xff]
  %v29 = vld [vmem:[%s1 + $0x10] sm:$0xff]
  %v30 = vld [vmem:[%s1 + $0x18] sm:$0xff]
  %32 = vset.pattern.permute.xlu0 0
  %33 = vperm.xlu0 %32, %v27
  %v34 = vpop.permute.xlu0 %33
  %37 = vset.pattern.permute.xlu0 0
  %38 = vperm.xlu0 %37, %v28
  %v39 = vpop.permute.xlu0 %38
  %42 = vset.pattern.permute.xlu0 0
  %43 = vperm.xlu0 %42, %v29
  %v44 = vpop.permute.xlu0 %43
  %47 = vset.pattern.permute.xlu0 0
  %48 = vperm.xlu0 %47, %v30
  %v49 = vpop.permute.xlu0 %48
  %v51 = vlaneseq
  %v52 = vshrl.u32 %v51, 7
  %v53 = vsub.s32 0, %v52
  %v54 = vrot.slane %v26, %v53
  %v55 = vmul.f32 %v34, %v54
  %v56 = vmul.f32 %v39, %v54
  %v57 = vmul.f32 %v44, %v54
  %v58 = vmul.f32 %v49, %v54
  %59 = vset.pattern.permute.xlu0 1
  %60 = vperm.xlu0 %59, %v27
  %v61 = vpop.permute.xlu0 %60
  %63 = vset.pattern.permute.xlu0 1
  %64 = vperm.xlu0 %63, %v28
  %v65 = vpop.permute.xlu0 %64
  %67 = vset.pattern.permute.xlu0 1
  %68 = vperm.xlu0 %67, %v29
  %v69 = vpop.permute.xlu0 %68
  %71 = vset.pattern.permute.xlu0 1
  %72 = vperm.xlu0 %71, %v30
  %v73 = vpop.permute.xlu0 %72
  %v75 = vlaneseq
  %v76 = vshrl.u32 %v75, 7
  %v77 = vsub.s32 1, %v76
  %v78 = vrot.slane %v26, %v77
  %v79 = vmul.f32 %v61, %v78
  %v80 = vmul.f32 %v65, %v78
  %v81 = vmul.f32 %v69, %v78
  %v82 = vmul.f32 %v73, %v78
  %v83 = vadd.f32 %v55, %v79
  %v84 = vadd.f32 %v56, %v80
  %v85 = vadd.f32 %v57, %v81
  %v86 = vadd.f32 %v58, %v82
  %87 = vset.pattern.permute.xlu0 2
  %88 = vperm.xlu0 %87, %v27
  %v89 = vpop.permute.xlu0 %88
  %91 = vset.pattern.permute.xlu0 2
  %92 = vperm.xlu0 %91, %v28
  %v93 = vpop.permute.xlu0 %92
  %95 = vset.pattern.permute.xlu0 2
  %96 = vperm.xlu0 %95, %v29
  %v97 = vpop.permute.xlu0 %96
  %99 = vset.pattern.permute.xlu0 2
  %100 = vperm.xlu0 %99, %v30
  %v101 = vpop.permute.xlu0 %100
  %v103 = vlaneseq
  %v104 = vshrl.u32 %v103, 7
  %v105 = vsub.s32 2, %v104
  %v106 = vrot.slane %v26, %v105
  %v107 = vmul.f32 %v89, %v106
  %v108 = vmul.f32 %v93, %v106
  %v109 = vmul.f32 %v97, %v106
  %v110 = vmul.f32 %v101, %v106
  %v111 = vadd.f32 %v83, %v107
  %v112 = vadd.f32 %v84, %v108
  %v113 = vadd.f32 %v85, %v109
  %v114 = vadd.f32 %v86, %v110
  %115 = vset.pattern.permute.xlu0 3
  %116 = vperm.xlu0 %115, %v27
  %v117 = vpop.permute.xlu0 %116
  %119 = vset.pattern.permute.xlu0 3
  %120 = vperm.xlu0 %119, %v28
  %v121 = vpop.permute.xlu0 %120
  %123 = vset.pattern.permute.xlu0 3
  %124 = vperm.xlu0 %123, %v29
  %v125 = vpop.permute.xlu0 %124
  %127 = vset.pattern.permute.xlu0 3
  %128 = vperm.xlu0 %127, %v30
  %v129 = vpop.permute.xlu0 %128
  %v131 = vlaneseq
  %v132 = vshrl.u32 %v131, 7
  %v133 = vsub.s32 3, %v132
  %v134 = vrot.slane %v26, %v133
  %v135 = vmul.f32 %v117, %v134
  %v136 = vmul.f32 %v121, %v134
  %v137 = vmul.f32 %v125, %v134
  %v138 = vmul.f32 %v129, %v134
  %v139 = vadd.f32 %v111, %v135
  %v140 = vadd.f32 %v112, %v136
  %v141 = vadd.f32 %v113, %v137
  %v142 = vadd.f32 %v114, %v138
  %v143 = vld [vmem:[%s2] sm:$0xff]
  %v144 = vld [vmem:[%s2 + $0x8] sm:$0xff]
  %v145 = vld [vmem:[%s2 + $0x10] sm:$0xff]
  %v146 = vld [vmem:[%s2 + $0x18] sm:$0xff]
  %148 = vset.pattern.permute.xlu0 0
  %149 = vperm.xlu0 %148, %v143
  %v150 = vpop.permute.xlu0 %149
  %153 = vset.pattern.permute.xlu0 0
  %154 = vperm.xlu0 %153, %v144
  %v155 = vpop.permute.xlu0 %154
  %158 = vset.pattern.permute.xlu0 0
  %159 = vperm.xlu0 %158, %v145
  %v160 = vpop.permute.xlu0 %159
  %163 = vset.pattern.permute.xlu0 0
  %164 = vperm.xlu0 %163, %v146
  %v165 = vpop.permute.xlu0 %164
  %v167 = vadd.f32 %v139, %v150
  %v168 = vadd.f32 %v140, %v155
  %v169 = vadd.f32 %v141, %v160
  %v170 = vadd.f32 %v142, %v165
  %v171 = vmax.f32 %v167, 0.0
  %v172 = vmax.f32 %v168, 0.0
  %v173 = vmax.f32 %v169, 0.0
  %v174 = vmax.f32 %v170, 0.0
  %v175 = vld [vmem:[%s3] sm:$0xff]
  %v176 = vld [vmem:[%s3 + $0x8] sm:$0xff]
  %v177 = vld [vmem:[%s3 + $0x10] sm:$0xff]
  %v178 = vld [vmem:[%s3 + $0x18] sm:$0xff]
  %v179 = vld [vmem:[%s4] sm:$0xff]
  %v180 = vld [vmem:[%s4 + $0x8] sm:$0xff]
  %v181 = vld [vmem:[%s4 + $0x10] sm:$0xff]
  %v182 = vld [vmem:[%s4 + $0x18] sm:$0xff]
  %184 = vset.pattern.permute.xlu0 0
  %185 = vperm.xlu0 %184, %v179
  %v186 = vpop.permute.xlu0 %185
  %189 = vset.pattern.permute.xlu0 0
  %190 = vperm.xlu0 %189, %v180
  %v191 = vpop.permute.xlu0 %190
  %194 = vset.pattern.permute.xlu0 0
  %195 = vperm.xlu0 %194, %v181
  %v196 = vpop.permute.xlu0 %195
  %199 = vset.pattern.permute.xlu0 0
  %200 = vperm.xlu0 %199, %v182
  %v201 = vpop.permute.xlu0 %200
  %vm203 = vcmask 261120
  %v205 = vsel %vm203, %v175, 0
  %v208 = vsel %vm203, %v176, 0
  %v211 = vsel %vm203, %v177, 0
  %v214 = vsel %vm203, %v178, 0
  %216 = vmatprep.subr.mxu0 0.0
  %217 = vmatpush1.msra.mxu0 %v171
  %218 = vmatprep.subr.mxu0 0.0
  %219 = vmatpush1.msra.mxu0 %v172
  %220 = vmatprep.subr.mxu0 0.0
  %221 = vmatpush1.msra.mxu0 %v173
  %222 = vmatprep.subr.mxu0 0.0
  %223 = vmatpush1.msra.mxu0 %v174
  %224 = vmatprep.subr.mxu0 0.0
  %225 = vmatpush1.msra.mxu0 0.0
  %226 = vmatprep.subr.mxu0 0.0
  %227 = vmatpush1.msra.mxu0 0.0
  %228 = vmatprep.subr.mxu0 0.0
  %229 = vmatpush1.msra.mxu0 0.0
  %230 = vmatprep.subr.mxu0 0.0
  %231 = vmatpush1.msra.mxu0 0.0
  %232 = vmatprep.subr.mxu0 0.0
  %233 = vmatpush1.msra.mxu0 0.0
  %234 = vmatprep.subr.mxu0 0.0
  %235 = vmatpush1.msra.mxu0 0.0
  %236 = vmatprep.subr.mxu0 0.0
  %237 = vmatpush1.msra.mxu0 0.0
  %238 = vmatprep.subr.mxu0 0.0
  %239 = vmatpush1.msra.mxu0 0.0
  %240 = vmatprep.subr.mxu0 0.0
  %241 = vmatpush1.msra.mxu0 0.0
  %242 = vmatprep.subr.mxu0 0.0
  %243 = vmatpush1.msra.mxu0 0.0
  %244 = vmatprep.subr.mxu0 0.0
  %245 = vmatpush1.msra.mxu0 0.0
  %246 = vmatprep.subr.mxu0 0.0
  %247 = vmatpush1.msra.mxu0 0.0
  %248 = vmatprep.subr.mxu0 0.0
  %249 = vmatpush1.msra.mxu0 0.0
  %250 = vmatprep.subr.mxu0 0.0
  %251 = vmatpush1.msra.mxu0 0.0
  %252 = vmatprep.subr.mxu0 0.0
  %253 = vmatpush1.msra.mxu0 0.0
  %254 = vmatprep.subr.mxu0 0.0
  %255 = vmatpush1.msra.mxu0 0.0
  %256 = vmatprep.subr.mxu0 0.0
  %257 = vmatpush1.msra.mxu0 0.0
  %258 = vmatprep.subr.mxu0 0.0
  %259 = vmatpush1.msra.mxu0 0.0
  %260 = vmatprep.subr.mxu0 0.0
  %261 = vmatpush1.msra.mxu0 0.0
  %262 = vmatprep.subr.mxu0 0.0
  %263 = vmatpush1.msra.mxu0 0.0
  %264 = vmatprep.subr.mxu0 0.0
  %265 = vmatpush1.msra.mxu0 0.0
  %266 = vmatprep.subr.mxu0 0.0
  %267 = vmatpush1.msra.mxu0 0.0
  %268 = vmatprep.subr.mxu0 0.0
  %269 = vmatpush1.msra.mxu0 0.0
  %270 = vmatprep.subr.mxu0 0.0
  %271 = vmatpush1.msra.mxu0 0.0
  %272 = vmatprep.subr.mxu0 0.0
  %273 = vmatpush1.msra.mxu0 0.0
  %274 = vmatprep.subr.mxu0 0.0
  %275 = vmatpush1.msra.mxu0 0.0
  %276 = vmatprep.subr.mxu0 0.0
  %277 = vmatpush1.msra.mxu0 0.0
  %278 = vmatprep.subr.mxu0 0.0
  %279 = vmatpush1.msra.mxu0 0.0
  %280 = vmatprep.mubr.f32.mxu0 0.0
  %281 = vmatmul.mubr.f32.gmra.mrb[0].mxu0 %v205
  %v282 = vpop.f32.mrb[0].mxu0
  %v283 = vadd.f32 %v186, %v282
  %v284 = vpop.f32.mrb[0].mxu0
  %285 = vmatprep.mubr.f32.mxu0 0.0
  %286 = vmatmul.mubr.f32.gmra.mrb[0].mxu0 %v208
  %v287 = vpop.f32.mrb[0].mxu0
  %v288 = vadd.f32 %v191, %v287
  %v289 = vpop.f32.mrb[0].mxu0
  %290 = vmatprep.mubr.f32.mxu0 0.0
  %291 = vmatmul.mubr.f32.gmra.mrb[0].mxu0 %v211
  %v292 = vpop.f32.mrb[0].mxu0
  %v293 = vadd.f32 %v196, %v292
  %v294 = vpop.f32.mrb[0].mxu0
  %295 = vmatprep.mubr.f32.mxu0 0.0
  %296 = vmatmul.mubr.f32.gmra.mrb[0].mxu0 %v214
  %v297 = vpop.f32.mrb[0].mxu0
  %v298 = vadd.f32 %v201, %v297
  %v299 = vpop.f32.mrb[0].mxu0
  %300 = vdwg.mxu0
  %v301 = vmax.f32 %v283, 0.0
  %v302 = vmax.f32 %v288, 0.0
  %v303 = vmax.f32 %v293, 0.0
  %v304 = vmax.f32 %v298, 0.0
  %v305 = vld [vmem:[%s5] sm:$0x3]
  %v306 = vld [vmem:[%s6] sm:$0x3]
  %308 = vset.pattern.permute.xlu0 0
  %309 = vperm.xlu0 %308, %v306
  %v310 = vpop.permute.xlu0 %309
  %v313 = vsel %vm203, %v305, 0
  %315 = vmatprep.subr.mxu0 0.0
  %316 = vmatpush1.msra.mxu0 %v301
  %317 = vmatprep.subr.mxu0 0.0
  %318 = vmatpush1.msra.mxu0 %v302
  %319 = vmatprep.subr.mxu0 0.0
  %320 = vmatpush1.msra.mxu0 %v303
  %321 = vmatprep.subr.mxu0 0.0
  %322 = vmatpush1.msra.mxu0 %v304
  %323 = vmatprep.subr.mxu0 0.0
  %324 = vmatpush1.msra.mxu0 0.0
  %325 = vmatprep.subr.mxu0 0.0
  %326 = vmatpush1.msra.mxu0 0.0
  %327 = vmatprep.subr.mxu0 0.0
  %328 = vmatpush1.msra.mxu0 0.0
  %329 = vmatprep.subr.mxu0 0.0
  %330 = vmatpush1.msra.mxu0 0.0
  %331 = vmatprep.subr.mxu0 0.0
  %332 = vmatpush1.msra.mxu0 0.0
  %333 = vmatprep.subr.mxu0 0.0
  %334 = vmatpush1.msra.mxu0 0.0
  %335 = vmatprep.subr.mxu0 0.0
  %336 = vmatpush1.msra.mxu0 0.0
  %337 = vmatprep.subr.mxu0 0.0
  %338 = vmatpush1.msra.mxu0 0.0
  %339 = vmatprep.subr.mxu0 0.0
  %340 = vmatpush1.msra.mxu0 0.0
  %341 = vmatprep.subr.mxu0 0.0
  %342 = vmatpush1.msra.mxu0 0.0
  %343 = vmatprep.subr.mxu0 0.0
  %344 = vmatpush1.msra.mxu0 0.0
  %345 = vmatprep.subr.mxu0 0.0
  %346 = vmatpush1.msra.mxu0 0.0
  %347 = vmatprep.subr.mxu0 0.0
  %348 = vmatpush1.msra.mxu0 0.0
  %349 = vmatprep.subr.mxu0 0.0
  %350 = vmatpush1.msra.mxu0 0.0
  %351 = vmatprep.subr.mxu0 0.0
  %352 = vmatpush1.msra.mxu0 0.0
  %353 = vmatprep.subr.mxu0 0.0
  %354 = vmatpush1.msra.mxu0 0.0
  %355 = vmatprep.subr.mxu0 0.0
  %356 = vmatpush1.msra.mxu0 0.0
  %357 = vmatprep.subr.mxu0 0.0
  %358 = vmatpush1.msra.mxu0 0.0
  %359 = vmatprep.subr.mxu0 0.0
  %360 = vmatpush1.msra.mxu0 0.0
  %361 = vmatprep.subr.mxu0 0.0
  %362 = vmatpush1.msra.mxu0 0.0
  %363 = vmatprep.subr.mxu0 0.0
  %364 = vmatpush1.msra.mxu0 0.0
  %365 = vmatprep.subr.mxu0 0.0
  %366 = vmatpush1.msra.mxu0 0.0
  %367 = vmatprep.subr.mxu0 0.0
  %368 = vmatpush1.msra.mxu0 0.0
  %369 = vmatprep.subr.mxu0 0.0
  %370 = vmatpush1.msra.mxu0 0.0
  %371 = vmatprep.subr.mxu0 0.0
  %372 = vmatpush1.msra.mxu0 0.0
  %373 = vmatprep.subr.mxu0 0.0
  %374 = vmatpush1.msra.mxu0 0.0
  %375 = vmatprep.subr.mxu0 0.0
  %376 = vmatpush1.msra.mxu0 0.0
  %377 = vmatprep.subr.mxu0 0.0
  %378 = vmatpush1.msra.mxu0 0.0
  %379 = vmatprep.mubr.f32.mxu0 0.0
  %380 = vmatmul.mubr.f32.gmra.mrb[0].mxu0 %v313
  %v381 = vpop.f32.mrb[0].mxu0
  %v382 = vadd.f32 %v310, %v381
  %v383 = vpop.f32.mrb[0].mxu0
  %384 = vdwg.mxu0
  %385 = vst [vmem:[%s7] sm:$0x3] %v382
  // Predicated region
  $region30: #{agent_forward.1} parent=0 // pred_check
    _
  $region31: #{agent_forward.1} parent=0 // pred_check_branch
    %387 = sbr.rel (0) target = $region33
  $region32: #{agent_forward.1} parent=0 // pred_region
    _
  $region33: #{agent_forward.1} parent=0 // pred_fallthru
    _
  // Predicated region
  $region34: #{agent_forward.1} parent=0 // pred_check
    _
  $region35: #{agent_forward.1} parent=0 // pred_check_branch
    %389 = sbr.rel (0) target = $region37
  $region36: #{agent_forward.1} parent=0 // pred_region
    _
  $region37: #{agent_forward.1} parent=0 // pred_fallthru
    _

</llo_original>
